<compile_context>
chip_gen: v7x
topology: tpu7x:2x2x1
jax: 0.10.0
libtpu: 0.0.40
codegen_flags: <defaults>
</compile_context>

<pallas_src>
import jax
import jax.numpy as jnp
from jax.experimental import pallas as pl
from jax.experimental.pallas import tpu as pltpu


def _vae_kernel(x_ref, eps_ref,
                ew1, eb1, ew2, eb2, ew3, eb3,
                dw1, db1, dw2, db2, dw3, db3,
                recon_ref, mulogvar_ref):
    """Whole VAE forward on one [TB, *] batch tile; weights VMEM-resident."""
    z_dim = eps_ref.shape[-1]
    x = x_ref[...]

    # ----- Encoder -----
    h = jnp.dot(x, ew1[...], preferred_element_type=jnp.float32) + eb1[...]
    h = jnp.maximum(h, 0.0)
    h = jnp.dot(h, ew2[...], preferred_element_type=jnp.float32) + eb2[...]
    h = jnp.maximum(h, 0.0)
    # Fused mu|logvar head: single matmul, single lane-dense output tile.
    ml = jnp.dot(h, ew3[...], preferred_element_type=jnp.float32) + eb3[...]
    mu = ml[:, :z_dim]
    logvar = ml[:, z_dim:]

    # ----- Reparameterize: z = mu + eps * exp(0.5 * logvar) -----
    std = jnp.exp(0.5 * logvar)
    z = mu + eps_ref[...] * std

    # ----- Decoder -----
    d = jnp.dot(z, dw1[...], preferred_element_type=jnp.float32) + db1[...]
    d = jnp.maximum(d, 0.0)
    d = jnp.dot(d, dw2[...], preferred_element_type=jnp.float32) + db2[...]
    d = jnp.maximum(d, 0.0)
    logits = jnp.dot(d, dw3[...], preferred_element_type=jnp.float32) + db3[...]

    recon_ref[...] = jax.nn.sigmoid(logits)
    mulogvar_ref[...] = ml


def _choose_batch_tile(batch):
    """Largest multiple-of-8 tile <= 256 that divides batch (else whole batch)."""
    if batch <= 256:
        return batch
    for tb in (256, 128, 64, 32, 16, 8):
        if batch % tb == 0:
            return tb
    return batch


@jax.jit
def vae_forward(x, eps, params):
    """params: dict of pre-transposed weights [in, out] and biases [1, out]."""
    batch, input_dim = x.shape
    z_dim = eps.shape[1]
    hidden_dim = params["ew1"].shape[1]

    # Fuse the mu/logvar projection weights (layout plumbing, traced once).
    ew3 = jnp.concatenate([params["ew31"], params["ew32"]], axis=1)
    eb3 = jnp.concatenate([params["eb31"], params["eb32"]], axis=1)

    weights = (
        params["ew1"], params["eb1"], params["ew2"], params["eb2"], ew3, eb3,
        params["dw1"], params["db1"], params["dw2"], params["db2"],
        params["dw3"], params["db3"],
    )

    tb = _choose_batch_tile(batch)
    grid = (batch // tb,)

    def batch_tile(cols):
        return pl.BlockSpec((tb, cols), lambda i: (i, 0))

    def resident(arr):
        return pl.BlockSpec(arr.shape, lambda i: (0, 0))

    # Advisory cost estimate (per full call).
    flops = 2 * batch * (input_dim * hidden_dim            # enc fc1
                         + hidden_dim * hidden_dim          # enc fc2
                         + hidden_dim * 2 * z_dim           # fused mu|logvar
                         + z_dim * hidden_dim               # dec fc1
                         + hidden_dim * hidden_dim          # dec fc2
                         + hidden_dim * input_dim)          # dec fc3
    transcendentals = batch * (z_dim + input_dim)           # exp + sigmoid
    bytes_accessed = 4 * (x.size + eps.size
                          + sum(int(w.size) for w in weights)
                          + batch * input_dim + batch * 2 * z_dim)

    recon, mulogvar = pl.pallas_call(
        _vae_kernel,
        grid=grid,
        out_shape=(
            jax.ShapeDtypeStruct((batch, input_dim), jnp.float32),   # recon
            jax.ShapeDtypeStruct((batch, 2 * z_dim), jnp.float32),   # mu|logvar
        ),
        in_specs=[batch_tile(input_dim), batch_tile(z_dim)]
                 + [resident(w) for w in weights],
        out_specs=(batch_tile(input_dim), batch_tile(2 * z_dim)),
        compiler_params=pltpu.CompilerParams(
            dimension_semantics=("parallel",)),
        cost_estimate=pl.CostEstimate(
            flops=flops,
            transcendentals=transcendentals,
            bytes_accessed=bytes_accessed),
    )(x, eps, *weights)

    mu = mulogvar[:, :z_dim]
    logvar = mulogvar[:, z_dim:]
    return recon, mu, logvar


def init_params(key, input_dim, hidden_dim, z_dim):
    """PyTorch-style Linear init (uniform +/- 1/sqrt(fan_in)).
    Weights returned already transposed to [in, out]; biases as [1, out]."""
    def linear(k, fan_in, fan_out):
        kw, kb = jax.random.split(k)
        bound = 1.0 / jnp.sqrt(fan_in)
        w = jax.random.uniform(kw, (fan_in, fan_out), jnp.float32, -bound, bound)
        b = jax.random.uniform(kb, (1, fan_out), jnp.float32, -bound, bound)
        return w, b

    keys = jax.random.split(key, 7)
    p = {}
    p["ew1"], p["eb1"] = linear(keys[0], input_dim, hidden_dim)
    p["ew2"], p["eb2"] = linear(keys[1], hidden_dim, hidden_dim)
    p["ew31"], p["eb31"] = linear(keys[2], hidden_dim, z_dim)
    p["ew32"], p["eb32"] = linear(keys[3], hidden_dim, z_dim)
    p["dw1"], p["db1"] = linear(keys[4], z_dim, hidden_dim)
    p["dw2"], p["db2"] = linear(keys[5], hidden_dim, hidden_dim)
    p["dw3"], p["db3"] = linear(keys[6], hidden_dim, input_dim)
    return p


def reference_forward(x, eps, p):
    """Pure-JAX reference for the same forward pass."""
    h = jax.nn.relu(x @ p["ew1"] + p["eb1"])
    h = jax.nn.relu(h @ p["ew2"] + p["eb2"])
    mu = h @ p["ew31"] + p["eb31"]
    logvar = h @ p["ew32"] + p["eb32"]
    z = mu + eps * jnp.exp(0.5 * logvar)
    d = jax.nn.relu(z @ p["dw1"] + p["db1"])
    d = jax.nn.relu(d @ p["dw2"] + p["db2"])
    recon = jax.nn.sigmoid(d @ p["dw3"] + p["db3"])
    return recon, mu, logvar


if __name__ == "__main__":
    # Small shapes consistent with the module: flat-vector VAE.
    batch, input_dim, hidden_dim, z_dim = 8, 64, 32, 16

    key = jax.random.PRNGKey(0)
    k_x, k_eps, k_p = jax.random.split(key, 3)

    x = jax.random.normal(k_x, (batch, input_dim), jnp.float32)
    # TODO(synk): eps (torch.randn_like) generated deterministically outside
    # the kernel so the kernel stays bit-reproducible against the JAX reference;
    # in-kernel pltpu PRNG would change the random stream.
    eps = jax.random.normal(k_eps, (batch, z_dim), jnp.float32)
    params = init_params(k_p, input_dim, hidden_dim, z_dim)

    recon, mu, logvar = vae_forward(x, eps, params)
    jax.block_until_ready((recon, mu, logvar))

    # Correctness check against pure-JAX reference.
    r_ref, mu_ref, lv_ref = reference_forward(x, eps, params)
    assert jnp.allclose(recon, r_ref, atol=1e-5, rtol=1e-5)
    assert jnp.allclose(mu, mu_ref, atol=1e-5, rtol=1e-5)
    assert jnp.allclose(logvar, lv_ref, atol=1e-5, rtol=1e-5)
    assert recon.shape == (batch, input_dim)
    assert mu.shape == (batch, z_dim) and logvar.shape == (batch, z_dim)

    print("KERNEL_OK")
</pallas_src>

<mosaic_0001>
module attributes {stable_mosaic.version = 11 : i64} {
  func.func @_vae_kernel(%arg0: i32, %arg1: memref<8x64xf32, #tpu.memory_space<vmem>>, %arg2: memref<8x16xf32, #tpu.memory_space<vmem>>, %arg3: memref<64x32xf32, #tpu.memory_space<vmem>>, %arg4: memref<1x32xf32, #tpu.memory_space<vmem>>, %arg5: memref<32x32xf32, #tpu.memory_space<vmem>>, %arg6: memref<1x32xf32, #tpu.memory_space<vmem>>, %arg7: memref<32x32xf32, #tpu.memory_space<vmem>>, %arg8: memref<1x32xf32, #tpu.memory_space<vmem>>, %arg9: memref<16x32xf32, #tpu.memory_space<vmem>>, %arg10: memref<1x32xf32, #tpu.memory_space<vmem>>, %arg11: memref<32x32xf32, #tpu.memory_space<vmem>>, %arg12: memref<1x32xf32, #tpu.memory_space<vmem>>, %arg13: memref<32x64xf32, #tpu.memory_space<vmem>>, %arg14: memref<1x64xf32, #tpu.memory_space<vmem>>, %arg15: memref<8x64xf32, #tpu.memory_space<vmem>>, %arg16: memref<8x32xf32, #tpu.memory_space<vmem>>) attributes {dimension_semantics = [#tpu.dimension_semantics<parallel>], iteration_bounds = array<i64: 1>, scalar_prefetch = 0 : i64, scratch_operands = 0 : i64, tpu.core_type = #tpu.core_type<tc>, window_params = [{transform_indices = @transform_0, window_bounds = array<i64: 8, 64>}, {transform_indices = @transform_1, window_bounds = array<i64: 8, 16>}, {pipeline_mode = #tpu.pipeline_mode<synchronous>, transform_indices = @transform_2, window_bounds = array<i64: 64, 32>}, {pipeline_mode = #tpu.pipeline_mode<synchronous>, transform_indices = @transform_3, window_bounds = array<i64: 1, 32>}, {pipeline_mode = #tpu.pipeline_mode<synchronous>, transform_indices = @transform_4, window_bounds = array<i64: 32, 32>}, {pipeline_mode = #tpu.pipeline_mode<synchronous>, transform_indices = @transform_5, window_bounds = array<i64: 1, 32>}, {pipeline_mode = #tpu.pipeline_mode<synchronous>, transform_indices = @transform_6, window_bounds = array<i64: 32, 32>}, {pipeline_mode = #tpu.pipeline_mode<synchronous>, transform_indices = @transform_7, window_bounds = array<i64: 1, 32>}, {pipeline_mode = #tpu.pipeline_mode<synchronous>, transform_indices = @transform_8, window_bounds = array<i64: 16, 32>}, {pipeline_mode = #tpu.pipeline_mode<synchronous>, transform_indices = @transform_9, window_bounds = array<i64: 1, 32>}, {pipeline_mode = #tpu.pipeline_mode<synchronous>, transform_indices = @transform_10, window_bounds = array<i64: 32, 32>}, {pipeline_mode = #tpu.pipeline_mode<synchronous>, transform_indices = @transform_11, window_bounds = array<i64: 1, 32>}, {pipeline_mode = #tpu.pipeline_mode<synchronous>, transform_indices = @transform_12, window_bounds = array<i64: 32, 64>}, {pipeline_mode = #tpu.pipeline_mode<synchronous>, transform_indices = @transform_13, window_bounds = array<i64: 1, 64>}, {transform_indices = @transform_14, window_bounds = array<i64: 8, 64>}, {transform_indices = @transform_15, window_bounds = array<i64: 8, 32>}]} {
    %c0 = arith.constant 0 : index
    %c0_0 = arith.constant 0 : index
    %0 = vector.load %arg1[%c0, %c0_0] : memref<8x64xf32, #tpu.memory_space<vmem>>, vector<8x64xf32>
    %c0_1 = arith.constant 0 : index
    %c0_2 = arith.constant 0 : index
    %1 = vector.load %arg3[%c0_1, %c0_2] : memref<64x32xf32, #tpu.memory_space<vmem>>, vector<64x32xf32>
    %cst = arith.constant dense<0.000000e+00> : vector<8x32xf32>
    %2 = tpu.matmul %0, %1, %cst {dimension_numbers = #tpu.dot_dimension_numbers<[1], [0], [0], [1], [0, 0, 1, 1], [], []>} : vector<8x64xf32>, vector<64x32xf32>, vector<8x32xf32> -> vector<8x32xf32>
    %c0_3 = arith.constant 0 : index
    %c0_4 = arith.constant 0 : index
    %3 = vector.load %arg4[%c0_3, %c0_4] : memref<1x32xf32, #tpu.memory_space<vmem>>, vector<1x32xf32>
    %4 = vector.broadcast %3 : vector<1x32xf32> to vector<8x32xf32>
    %5 = arith.addf %2, %4 : vector<8x32xf32>
    %cst_5 = arith.constant 0.000000e+00 : f32
    %6 = vector.broadcast %cst_5 : f32 to vector<8x32xf32>
    %7 = arith.maximumf %5, %6 : vector<8x32xf32>
    %c0_6 = arith.constant 0 : index
    %c0_7 = arith.constant 0 : index
    %8 = vector.load %arg5[%c0_6, %c0_7] : memref<32x32xf32, #tpu.memory_space<vmem>>, vector<32x32xf32>
    %cst_8 = arith.constant dense<0.000000e+00> : vector<8x32xf32>
    %9 = tpu.matmul %7, %8, %cst_8 {dimension_numbers = #tpu.dot_dimension_numbers<[1], [0], [0], [1], [0, 0, 1, 1], [], []>} : vector<8x32xf32>, vector<32x32xf32>, vector<8x32xf32> -> vector<8x32xf32>
    %c0_9 = arith.constant 0 : index
    %c0_10 = arith.constant 0 : index
    %10 = vector.load %arg6[%c0_9, %c0_10] : memref<1x32xf32, #tpu.memory_space<vmem>>, vector<1x32xf32>
    %11 = vector.broadcast %10 : vector<1x32xf32> to vector<8x32xf32>
    %12 = arith.addf %9, %11 : vector<8x32xf32>
    %cst_11 = arith.constant 0.000000e+00 : f32
    %13 = vector.broadcast %cst_11 : f32 to vector<8x32xf32>
    %14 = arith.maximumf %12, %13 : vector<8x32xf32>
    %c0_12 = arith.constant 0 : index
    %c0_13 = arith.constant 0 : index
    %15 = vector.load %arg7[%c0_12, %c0_13] : memref<32x32xf32, #tpu.memory_space<vmem>>, vector<32x32xf32>
    %cst_14 = arith.constant dense<0.000000e+00> : vector<8x32xf32>
    %16 = tpu.matmul %14, %15, %cst_14 {dimension_numbers = #tpu.dot_dimension_numbers<[1], [0], [0], [1], [0, 0, 1, 1], [], []>} : vector<8x32xf32>, vector<32x32xf32>, vector<8x32xf32> -> vector<8x32xf32>
    %c0_15 = arith.constant 0 : index
    %c0_16 = arith.constant 0 : index
    %17 = vector.load %arg8[%c0_15, %c0_16] : memref<1x32xf32, #tpu.memory_space<vmem>>, vector<1x32xf32>
    %18 = vector.broadcast %17 : vector<1x32xf32> to vector<8x32xf32>
    %19 = arith.addf %16, %18 : vector<8x32xf32>
    %20 = vector.extract_strided_slice %19 {offsets = [0, 0], sizes = [8, 16], strides = [1, 1]} : vector<8x32xf32> to vector<8x16xf32>
    %21 = vector.extract_strided_slice %19 {offsets = [0, 16], sizes = [8, 16], strides = [1, 1]} : vector<8x32xf32> to vector<8x16xf32>
    %cst_17 = arith.constant 5.000000e-01 : f32
    %22 = vector.broadcast %cst_17 : f32 to vector<8x16xf32>
    %23 = arith.mulf %22, %21 : vector<8x16xf32>
    %24 = math.exp %23 : vector<8x16xf32>
    %c0_18 = arith.constant 0 : index
    %c0_19 = arith.constant 0 : index
    %25 = vector.load %arg2[%c0_18, %c0_19] : memref<8x16xf32, #tpu.memory_space<vmem>>, vector<8x16xf32>
    %26 = arith.mulf %25, %24 : vector<8x16xf32>
    %27 = arith.addf %20, %26 : vector<8x16xf32>
    %c0_20 = arith.constant 0 : index
    %c0_21 = arith.constant 0 : index
    %28 = vector.load %arg9[%c0_20, %c0_21] : memref<16x32xf32, #tpu.memory_space<vmem>>, vector<16x32xf32>
    %cst_22 = arith.constant dense<0.000000e+00> : vector<8x32xf32>
    %29 = tpu.matmul %27, %28, %cst_22 {dimension_numbers = #tpu.dot_dimension_numbers<[1], [0], [0], [1], [0, 0, 1, 1], [], []>} : vector<8x16xf32>, vector<16x32xf32>, vector<8x32xf32> -> vector<8x32xf32>
    %c0_23 = arith.constant 0 : index
    %c0_24 = arith.constant 0 : index
    %30 = vector.load %arg10[%c0_23, %c0_24] : memref<1x32xf32, #tpu.memory_space<vmem>>, vector<1x32xf32>
    %31 = vector.broadcast %30 : vector<1x32xf32> to vector<8x32xf32>
    %32 = arith.addf %29, %31 : vector<8x32xf32>
    %cst_25 = arith.constant 0.000000e+00 : f32
    %33 = vector.broadcast %cst_25 : f32 to vector<8x32xf32>
    %34 = arith.maximumf %32, %33 : vector<8x32xf32>
    %c0_26 = arith.constant 0 : index
    %c0_27 = arith.constant 0 : index
    %35 = vector.load %arg11[%c0_26, %c0_27] : memref<32x32xf32, #tpu.memory_space<vmem>>, vector<32x32xf32>
    %cst_28 = arith.constant dense<0.000000e+00> : vector<8x32xf32>
    %36 = tpu.matmul %34, %35, %cst_28 {dimension_numbers = #tpu.dot_dimension_numbers<[1], [0], [0], [1], [0, 0, 1, 1], [], []>} : vector<8x32xf32>, vector<32x32xf32>, vector<8x32xf32> -> vector<8x32xf32>
    %c0_29 = arith.constant 0 : index
    %c0_30 = arith.constant 0 : index
    %37 = vector.load %arg12[%c0_29, %c0_30] : memref<1x32xf32, #tpu.memory_space<vmem>>, vector<1x32xf32>
    %38 = vector.broadcast %37 : vector<1x32xf32> to vector<8x32xf32>
    %39 = arith.addf %36, %38 : vector<8x32xf32>
    %cst_31 = arith.constant 0.000000e+00 : f32
    %40 = vector.broadcast %cst_31 : f32 to vector<8x32xf32>
    %41 = arith.maximumf %39, %40 : vector<8x32xf32>
    %c0_32 = arith.constant 0 : index
    %c0_33 = arith.constant 0 : index
    %42 = vector.load %arg13[%c0_32, %c0_33] : memref<32x64xf32, #tpu.memory_space<vmem>>, vector<32x64xf32>
    %cst_34 = arith.constant dense<0.000000e+00> : vector<8x64xf32>
    %43 = tpu.matmul %41, %42, %cst_34 {dimension_numbers = #tpu.dot_dimension_numbers<[1], [0], [0], [1], [0, 0, 1, 1], [], []>} : vector<8x32xf32>, vector<32x64xf32>, vector<8x64xf32> -> vector<8x64xf32>
    %c0_35 = arith.constant 0 : index
    %c0_36 = arith.constant 0 : index
    %44 = vector.load %arg14[%c0_35, %c0_36] : memref<1x64xf32, #tpu.memory_space<vmem>>, vector<1x64xf32>
    %45 = vector.broadcast %44 : vector<1x64xf32> to vector<8x64xf32>
    %46 = arith.addf %43, %45 : vector<8x64xf32>
    %47 = arith.negf %46 : vector<8x64xf32>
    %48 = math.exp %47 : vector<8x64xf32>
    %cst_37 = arith.constant 1.000000e+00 : f32
    %49 = vector.broadcast %cst_37 : f32 to vector<8x64xf32>
    %50 = arith.addf %49, %48 : vector<8x64xf32>
    %51 = arith.divf %49, %50 : vector<8x64xf32>
    %c0_38 = arith.constant 0 : index
    %c0_39 = arith.constant 0 : index
    %52 = vector.load %arg15[%c0_38, %c0_39] : memref<8x64xf32, #tpu.memory_space<vmem>>, vector<8x64xf32>
    tpu.vector_store %arg15[%c0_38, %c0_39], %51 {strides = array<i32>} : memref<8x64xf32, #tpu.memory_space<vmem>>, vector<8x64xf32>,
    %c0_40 = arith.constant 0 : index
    %c0_41 = arith.constant 0 : index
    %53 = vector.load %arg16[%c0_40, %c0_41] : memref<8x32xf32, #tpu.memory_space<vmem>>, vector<8x32xf32>
    tpu.vector_store %arg16[%c0_40, %c0_41], %19 {strides = array<i32>} : memref<8x32xf32, #tpu.memory_space<vmem>>, vector<8x32xf32>,
    return
  }
  func.func @transform_0(%arg0: i32) -> (i32, i32) {
    %c0_i32 = arith.constant 0 : i32
    %c0_i32_0 = arith.constant 0 : i32
    return %arg0, %c0_i32 : i32, i32
  }
  func.func @transform_1(%arg0: i32) -> (i32, i32) {
    %c0_i32 = arith.constant 0 : i32
    %c0_i32_0 = arith.constant 0 : i32
    return %arg0, %c0_i32 : i32, i32
  }
  func.func @transform_2(%arg0: i32) -> (i32, i32) {
    %c0_i32 = arith.constant 0 : i32
    %c0_i32_0 = arith.constant 0 : i32
    %c0_i32_1 = arith.constant 0 : i32
    return %c0_i32, %c0_i32_0 : i32, i32
  }
  func.func @transform_3(%arg0: i32) -> (i32, i32) {
    %c0_i32 = arith.constant 0 : i32
    %c0_i32_0 = arith.constant 0 : i32
    %c0_i32_1 = arith.constant 0 : i32
    return %c0_i32, %c0_i32_0 : i32, i32
  }
  func.func @transform_4(%arg0: i32) -> (i32, i32) {
    %c0_i32 = arith.constant 0 : i32
    %c0_i32_0 = arith.constant 0 : i32
    %c0_i32_1 = arith.constant 0 : i32
    return %c0_i32, %c0_i32_0 : i32, i32
  }
  func.func @transform_5(%arg0: i32) -> (i32, i32) {
    %c0_i32 = arith.constant 0 : i32
    %c0_i32_0 = arith.constant 0 : i32
    %c0_i32_1 = arith.constant 0 : i32
    return %c0_i32, %c0_i32_0 : i32, i32
  }
  func.func @transform_6(%arg0: i32) -> (i32, i32) {
    %c0_i32 = arith.constant 0 : i32
    %c0_i32_0 = arith.constant 0 : i32
    %c0_i32_1 = arith.constant 0 : i32
    return %c0_i32, %c0_i32_0 : i32, i32
  }
  func.func @transform_7(%arg0: i32) -> (i32, i32) {
    %c0_i32 = arith.constant 0 : i32
    %c0_i32_0 = arith.constant 0 : i32
    %c0_i32_1 = arith.constant 0 : i32
    return %c0_i32, %c0_i32_0 : i32, i32
  }
  func.func @transform_8(%arg0: i32) -> (i32, i32) {
    %c0_i32 = arith.constant 0 : i32
    %c0_i32_0 = arith.constant 0 : i32
    %c0_i32_1 = arith.constant 0 : i32
    return %c0_i32, %c0_i32_0 : i32, i32
  }
  func.func @transform_9(%arg0: i32) -> (i32, i32) {
    %c0_i32 = arith.constant 0 : i32
    %c0_i32_0 = arith.constant 0 : i32
    %c0_i32_1 = arith.constant 0 : i32
    return %c0_i32, %c0_i32_0 : i32, i32
  }
  func.func @transform_10(%arg0: i32) -> (i32, i32) {
    %c0_i32 = arith.constant 0 : i32
    %c0_i32_0 = arith.constant 0 : i32
    %c0_i32_1 = arith.constant 0 : i32
    return %c0_i32, %c0_i32_0 : i32, i32
  }
  func.func @transform_11(%arg0: i32) -> (i32, i32) {
    %c0_i32 = arith.constant 0 : i32
    %c0_i32_0 = arith.constant 0 : i32
    %c0_i32_1 = arith.constant 0 : i32
    return %c0_i32, %c0_i32_0 : i32, i32
  }
  func.func @transform_12(%arg0: i32) -> (i32, i32) {
    %c0_i32 = arith.constant 0 : i32
    %c0_i32_0 = arith.constant 0 : i32
    %c0_i32_1 = arith.constant 0 : i32
    return %c0_i32, %c0_i32_0 : i32, i32
  }
  func.func @transform_13(%arg0: i32) -> (i32, i32) {
    %c0_i32 = arith.constant 0 : i32
    %c0_i32_0 = arith.constant 0 : i32
    %c0_i32_1 = arith.constant 0 : i32
    return %c0_i32, %c0_i32_0 : i32, i32
  }
  func.func @transform_14(%arg0: i32) -> (i32, i32) {
    %c0_i32 = arith.constant 0 : i32
    %c0_i32_0 = arith.constant 0 : i32
    return %arg0, %c0_i32 : i32, i32
  }
  func.func @transform_15(%arg0: i32) -> (i32, i32) {
    %c0_i32 = arith.constant 0 : i32
    %c0_i32_0 = arith.constant 0 : i32
    return %arg0, %c0_i32 : i32, i32
  }
}

</mosaic_0001>

<llo_original>
// kernel: vae_forward.1
$region0: #{vae_forward.1}
  #allocation0 [shape = 'u32[]', space=smem, size = 0x4, offset = 0x4, fixed_abs, tag = 'smem constant byte address 0x4 - core index']
  #allocation1 [shape = 'u32[144,128]{1,0:T(1,128)}', space=vmem, size = 0x12000, scoped, tag = 'internal scratch']
  %s0 = inlined_call_operand.vmem [shape: f32[8,64], index: 0, kind: input, shape index: {}]
  %s1 = inlined_call_operand.vmem [shape: f32[8,16], index: 1, kind: input, shape index: {}]
  %s2 = inlined_call_operand.vmem [shape: f32[64,32], index: 2, kind: input, shape index: {}]
  %s3 = inlined_call_operand.vmem [shape: f32[1,32], index: 3, kind: input, shape index: {}]
  %s4 = inlined_call_operand.vmem [shape: f32[32,32], index: 4, kind: input, shape index: {}]
  %s5 = inlined_call_operand.vmem [shape: f32[1,32], index: 5, kind: input, shape index: {}]
  %s6 = inlined_call_operand.vmem [shape: f32[32,32], index: 6, kind: input, shape index: {}]
  %s7 = inlined_call_operand.vmem [shape: f32[1,32], index: 7, kind: input, shape index: {}]
  %s8 = inlined_call_operand.vmem [shape: f32[16,32], index: 8, kind: input, shape index: {}]
  %s9 = inlined_call_operand.vmem [shape: f32[1,32], index: 9, kind: input, shape index: {}]
  %s10 = inlined_call_operand.vmem [shape: f32[32,32], index: 10, kind: input, shape index: {}]
  %s11 = inlined_call_operand.vmem [shape: f32[1,32], index: 11, kind: input, shape index: {}]
  %s12 = inlined_call_operand.vmem [shape: f32[32,64], index: 12, kind: input, shape index: {}]
  %s13 = inlined_call_operand.vmem [shape: f32[1,64], index: 13, kind: input, shape index: {}]
  %s14 = inlined_call_operand.hbm [shape: f32[8,64], index: 14, kind: output, shape index: {0}]
  %s15 = inlined_call_operand.vmem [shape: f32[8,32], index: 15, kind: output, shape index: {1}]
  %16 = xla_tuple %s14, %s15
  %s17 = sld [smem:[#allocation0]]
  $region74: #{vae_forward.1} parent=0
    _
  %s19 = ssub.s32 1, %s17
  %s20 = scalar_select 0, %s19, %s17
  $region1: #{vae_forward.1} parent=0
    #allocation2 [shape = 'u8[4096]{0}', space=vmem, size = 0x1000, scoped, tag = 'output window, operand 0, single buffered']
    #allocation3 [shape = 's32[1]{0}', space=sflag, size = 0x4, scoped, tag = 'scoped memory for vae_forward.1']
    %21 = vsyncpa [#allocation3], 0
    // Predicated region
    $region2: #{vae_forward.1} parent=1 // pred_check
      _
    $region3: #{vae_forward.1} parent=1 // pred_check_branch
      %23 = sbr.rel (0) target = $region5
    $region4: #{vae_forward.1} parent=1 // pred_region
      _
    $region5: #{vae_forward.1} parent=1 // pred_fallthru
      _
    // Predicated region
    $region6: #{vae_forward.1} parent=1 // pred_check
      _
    $region7: #{vae_forward.1} parent=1 // pred_check_branch
      %25 = sbr.rel (0) target = $region9
    $region8: #{vae_forward.1} parent=1 // pred_region
      _
    $region9: #{vae_forward.1} parent=1 // pred_fallthru
      _
    // Predicated region
    $region10: #{vae_forward.1} parent=1 // pred_check
      _
    $region11: #{vae_forward.1} parent=1 // pred_check_branch
      %27 = sbr.rel (0) target = $region13
    $region12: #{vae_forward.1} parent=1 // pred_region
      _
    $region13: #{vae_forward.1} parent=1 // pred_fallthru
      _
    // Predicated region
    $region14: #{vae_forward.1} parent=1 // pred_check
      _
    $region15: #{vae_forward.1} parent=1 // pred_check_branch
      %29 = sbr.rel (0) target = $region17
    $region16: #{vae_forward.1} parent=1 // pred_region
      _
    $region17: #{vae_forward.1} parent=1 // pred_fallthru
      _
    // Predicated region
    $region18: #{vae_forward.1} parent=1 // pred_check
      _
    $region19: #{vae_forward.1} parent=1 // pred_check_branch
      %31 = sbr.rel (0) target = $region21
    $region20: #{vae_forward.1} parent=1 // pred_region
      _
    $region21: #{vae_forward.1} parent=1 // pred_fallthru
      _
    // Predicated region
    $region22: #{vae_forward.1} parent=1 // pred_check
      _
    $region23: #{vae_forward.1} parent=1 // pred_check_branch
      %33 = sbr.rel (0) target = $region25
    $region24: #{vae_forward.1} parent=1 // pred_region
      _
    $region25: #{vae_forward.1} parent=1 // pred_fallthru
      _
    // Predicated region
    $region26: #{vae_forward.1} parent=1 // pred_check
      _
    $region27: #{vae_forward.1} parent=1 // pred_check_branch
      %35 = sbr.rel (0) target = $region29
    $region28: #{vae_forward.1} parent=1 // pred_region
      _
    $region29: #{vae_forward.1} parent=1 // pred_fallthru
      _
    // Predicated region
    $region30: #{vae_forward.1} parent=1 // pred_check
      _
    $region31: #{vae_forward.1} parent=1 // pred_check_branch
      %37 = sbr.rel (0) target = $region33
    $region32: #{vae_forward.1} parent=1 // pred_region
      _
    $region33: #{vae_forward.1} parent=1 // pred_fallthru
      _
    // Predicated region
    $region34: #{vae_forward.1} parent=1 // pred_check
      _
    $region35: #{vae_forward.1} parent=1 // pred_check_branch
      %39 = sbr.rel (0) target = $region37
    $region36: #{vae_forward.1} parent=1 // pred_region
      _
    $region37: #{vae_forward.1} parent=1 // pred_fallthru
      _
    // Predicated region
    $region38: #{vae_forward.1} parent=1 // pred_check
      _
    $region39: #{vae_forward.1} parent=1 // pred_check_branch
      %41 = sbr.rel (0) target = $region41
    $region40: #{vae_forward.1} parent=1 // pred_region
      _
    $region41: #{vae_forward.1} parent=1 // pred_fallthru
      _
    // Predicated region
    $region42: #{vae_forward.1} parent=1 // pred_check
      _
    $region43: #{vae_forward.1} parent=1 // pred_check_branch
      %43 = sbr.rel (0) target = $region45
    $region44: #{vae_forward.1} parent=1 // pred_region
      _
    $region45: #{vae_forward.1} parent=1 // pred_fallthru
      _
    // Predicated region
    $region46: #{vae_forward.1} parent=1 // pred_check
      _
    $region47: #{vae_forward.1} parent=1 // pred_check_branch
      %45 = sbr.rel (0) target = $region49
    $region48: #{vae_forward.1} parent=1 // pred_region
      _
    $region49: #{vae_forward.1} parent=1 // pred_fallthru
      _
    // Predicated region
    $region50: #{vae_forward.1} parent=1 // pred_check
      _
    $region51: #{vae_forward.1} parent=1 // pred_check_branch
      %47 = sbr.rel (0) target = $region53
    $region52: #{vae_forward.1} parent=1 // pred_region
      _
    $region53: #{vae_forward.1} parent=1 // pred_fallthru
      _
    // Predicated region
    $region54: #{vae_forward.1} parent=1 // pred_check
      _
    $region55: #{vae_forward.1} parent=1 // pred_check_branch
      %49 = sbr.rel (0) target = $region57
    $region56: #{vae_forward.1} parent=1 // pred_region
      _
    $region57: #{vae_forward.1} parent=1 // pred_fallthru
      _
    %v50 = vld [vmem:[%s0] sm:$0xff]
    %v51 = vld [vmem:[%s2] sm:$0xff]
    %v52 = vld [vmem:[%s2 + $0x8] sm:$0xff]
    %v53 = vld [vmem:[%s2 + $0x10] sm:$0xff]
    %v54 = vld [vmem:[%s2 + $0x18] sm:$0xff]
    %v55 = vld [vmem:[%s2 + $0x20] sm:$0xff]
    %v56 = vld [vmem:[%s2 + $0x28] sm:$0xff]
    %v57 = vld [vmem:[%s2 + $0x30] sm:$0xff]
    %v58 = vld [vmem:[%s2 + $0x38] sm:$0xff]
    %v59 = vld [vmem:[%s3] sm:$0x1]
    %v61 = vlaneseq
    %v62 = vshrl.u32 %v61, 7
    %v63 = vsub.s32 0, %v62
    %v64 = vrot.slane %v59, %v63
    %vm66 = vcmask 523264
    %v68 = vsel %vm66, %v50, 0
    %70 = vmatprep.subr.mxu0 0.0
    %71 = vmatpush1.msra.mxu0 %v51
    %72 = vmatprep.subr.mxu0 0.0
    %73 = vmatpush1.msra.mxu0 %v52
    %74 = vmatprep.subr.mxu0 0.0
    %75 = vmatpush1.msra.mxu0 %v53
    %76 = vmatprep.subr.mxu0 0.0
    %77 = vmatpush1.msra.mxu0 %v54
    %78 = vmatprep.subr.mxu0 0.0
    %79 = vmatpush1.msra.mxu0 %v55
    %80 = vmatprep.subr.mxu0 0.0
    %81 = vmatpush1.msra.mxu0 %v56
    %82 = vmatprep.subr.mxu0 0.0
    %83 = vmatpush1.msra.mxu0 %v57
    %84 = vmatprep.subr.mxu0 0.0
    %85 = vmatpush1.msra.mxu0 %v58
    %86 = vmatprep.subr.mxu0 0.0
    %87 = vmatpush1.msra.mxu0 0.0
    %88 = vmatprep.subr.mxu0 0.0
    %89 = vmatpush1.msra.mxu0 0.0
    %90 = vmatprep.subr.mxu0 0.0
    %91 = vmatpush1.msra.mxu0 0.0
    %92 = vmatprep.subr.mxu0 0.0
    %93 = vmatpush1.msra.mxu0 0.0
    %94 = vmatprep.subr.mxu0 0.0
    %95 = vmatpush1.msra.mxu0 0.0
    %96 = vmatprep.subr.mxu0 0.0
    %97 = vmatpush1.msra.mxu0 0.0
    %98 = vmatprep.subr.mxu0 0.0
    %99 = vmatpush1.msra.mxu0 0.0
    %100 = vmatprep.subr.mxu0 0.0
    %101 = vmatpush1.msra.mxu0 0.0
    %102 = vmatprep.subr.mxu0 0.0
    %103 = vmatpush1.msra.mxu0 0.0
    %104 = vmatprep.subr.mxu0 0.0
    %105 = vmatpush1.msra.mxu0 0.0
    %106 = vmatprep.subr.mxu0 0.0
    %107 = vmatpush1.msra.mxu0 0.0
    %108 = vmatprep.subr.mxu0 0.0
    %109 = vmatpush1.msra.mxu0 0.0
    %110 = vmatprep.subr.mxu0 0.0
    %111 = vmatpush1.msra.mxu0 0.0
    %112 = vmatprep.subr.mxu0 0.0
    %113 = vmatpush1.msra.mxu0 0.0
    %114 = vmatprep.subr.mxu0 0.0
    %115 = vmatpush1.msra.mxu0 0.0
    %116 = vmatprep.subr.mxu0 0.0
    %117 = vmatpush1.msra.mxu0 0.0
    %118 = vmatprep.subr.mxu0 0.0
    %119 = vmatpush1.msra.mxu0 0.0
    %120 = vmatprep.subr.mxu0 0.0
    %121 = vmatpush1.msra.mxu0 0.0
    %122 = vmatprep.subr.mxu0 0.0
    %123 = vmatpush1.msra.mxu0 0.0
    %124 = vmatprep.subr.mxu0 0.0
    %125 = vmatpush1.msra.mxu0 0.0
    %126 = vmatprep.subr.mxu0 0.0
    %127 = vmatpush1.msra.mxu0 0.0
    %128 = vmatprep.subr.mxu0 0.0
    %129 = vmatpush1.msra.mxu0 0.0
    %130 = vmatprep.subr.mxu0 0.0
    %131 = vmatpush1.msra.mxu0 0.0
    %132 = vmatprep.subr.mxu0 0.0
    %133 = vmatpush1.msra.mxu0 0.0
    %134 = vmatprep.mubr.f32.mxu0 0.0
    %135 = vmatmul.mubr.f32.gmra.mrb[0].mxu0 %v68
    %v136 = vpop.f32.mrb[0].mxu0
    %v137 = vadd.f32 %v64, %v136
    %v138 = vpop.f32.mrb[0].mxu0
    %139 = vdwg.mxu0
    %v140 = vmax.f32 %v137, 0.0
    %v141 = vld [vmem:[%s4] sm:$0xff]
    %v142 = vld [vmem:[%s4 + $0x8] sm:$0xff]
    %v143 = vld [vmem:[%s4 + $0x10] sm:$0xff]
    %v144 = vld [vmem:[%s4 + $0x18] sm:$0xff]
    %v145 = vld [vmem:[%s5] sm:$0x1]
    %v147 = vlaneseq
    %v148 = vshrl.u32 %v147, 7
    %v149 = vsub.s32 0, %v148
    %v150 = vrot.slane %v145, %v149
    %vm152 = vcmask 261120
    %v154 = vsel %vm152, %v140, 0
    %156 = vmatprep.subr.mxu0 0.0
    %157 = vmatpush1.msra.mxu0 %v141
    %158 = vmatprep.subr.mxu0 0.0
    %159 = vmatpush1.msra.mxu0 %v142
    %160 = vmatprep.subr.mxu0 0.0
    %161 = vmatpush1.msra.mxu0 %v143
    %162 = vmatprep.subr.mxu0 0.0
    %163 = vmatpush1.msra.mxu0 %v144
    %164 = vmatprep.subr.mxu0 0.0
    %165 = vmatpush1.msra.mxu0 0.0
    %166 = vmatprep.subr.mxu0 0.0
    %167 = vmatpush1.msra.mxu0 0.0
    %168 = vmatprep.subr.mxu0 0.0
    %169 = vmatpush1.msra.mxu0 0.0
    %170 = vmatprep.subr.mxu0 0.0
    %171 = vmatpush1.msra.mxu0 0.0
    %172 = vmatprep.subr.mxu0 0.0
    %173 = vmatpush1.msra.mxu0 0.0
    %174 = vmatprep.subr.mxu0 0.0
    %175 = vmatpush1.msra.mxu0 0.0
    %176 = vmatprep.subr.mxu0 0.0
    %177 = vmatpush1.msra.mxu0 0.0
    %178 = vmatprep.subr.mxu0 0.0
    %179 = vmatpush1.msra.mxu0 0.0
    %180 = vmatprep.subr.mxu0 0.0
    %181 = vmatpush1.msra.mxu0 0.0
    %182 = vmatprep.subr.mxu0 0.0
    %183 = vmatpush1.msra.mxu0 0.0
    %184 = vmatprep.subr.mxu0 0.0
    %185 = vmatpush1.msra.mxu0 0.0
    %186 = vmatprep.subr.mxu0 0.0
    %187 = vmatpush1.msra.mxu0 0.0
    %188 = vmatprep.subr.mxu0 0.0
    %189 = vmatpush1.msra.mxu0 0.0
    %190 = vmatprep.subr.mxu0 0.0
    %191 = vmatpush1.msra.mxu0 0.0
    %192 = vmatprep.subr.mxu0 0.0
    %193 = vmatpush1.msra.mxu0 0.0
    %194 = vmatprep.subr.mxu0 0.0
    %195 = vmatpush1.msra.mxu0 0.0
    %196 = vmatprep.subr.mxu0 0.0
    %197 = vmatpush1.msra.mxu0 0.0
    %198 = vmatprep.subr.mxu0 0.0
    %199 = vmatpush1.msra.mxu0 0.0
    %200 = vmatprep.subr.mxu0 0.0
    %201 = vmatpush1.msra.mxu0 0.0
    %202 = vmatprep.subr.mxu0 0.0
    %203 = vmatpush1.msra.mxu0 0.0
    %204 = vmatprep.subr.mxu0 0.0
    %205 = vmatpush1.msra.mxu0 0.0
    %206 = vmatprep.subr.mxu0 0.0
    %207 = vmatpush1.msra.mxu0 0.0
    %208 = vmatprep.subr.mxu0 0.0
    %209 = vmatpush1.msra.mxu0 0.0
    %210 = vmatprep.subr.mxu0 0.0
    %211 = vmatpush1.msra.mxu0 0.0
    %212 = vmatprep.subr.mxu0 0.0
    %213 = vmatpush1.msra.mxu0 0.0
    %214 = vmatprep.subr.mxu0 0.0
    %215 = vmatpush1.msra.mxu0 0.0
    %216 = vmatprep.subr.mxu0 0.0
    %217 = vmatpush1.msra.mxu0 0.0
    %218 = vmatprep.subr.mxu0 0.0
    %219 = vmatpush1.msra.mxu0 0.0
    %220 = vmatprep.mubr.f32.mxu0 0.0
    %221 = vmatmul.mubr.f32.gmra.mrb[0].mxu0 %v154
    %v222 = vpop.f32.mrb[0].mxu0
    %v223 = vadd.f32 %v150, %v222
    %v224 = vpop.f32.mrb[0].mxu0
    %225 = vdwg.mxu0
    %v226 = vmax.f32 %v223, 0.0
    %v227 = vld [vmem:[%s6] sm:$0xff]
    %v228 = vld [vmem:[%s6 + $0x8] sm:$0xff]
    %v229 = vld [vmem:[%s6 + $0x10] sm:$0xff]
    %v230 = vld [vmem:[%s6 + $0x18] sm:$0xff]
    %v231 = vld [vmem:[%s7] sm:$0x1]
    %v233 = vlaneseq
    %v234 = vshrl.u32 %v233, 7
    %v235 = vsub.s32 0, %v234
    %v236 = vrot.slane %v231, %v235
    %v239 = vsel %vm152, %v226, 0
    %241 = vmatprep.subr.mxu0 0.0
    %242 = vmatpush1.msra.mxu0 %v227
    %243 = vmatprep.subr.mxu0 0.0
    %244 = vmatpush1.msra.mxu0 %v228
    %245 = vmatprep.subr.mxu0 0.0
    %246 = vmatpush1.msra.mxu0 %v229
    %247 = vmatprep.subr.mxu0 0.0
    %248 = vmatpush1.msra.mxu0 %v230
    %249 = vmatprep.subr.mxu0 0.0
    %250 = vmatpush1.msra.mxu0 0.0
    %251 = vmatprep.subr.mxu0 0.0
    %252 = vmatpush1.msra.mxu0 0.0
    %253 = vmatprep.subr.mxu0 0.0
    %254 = vmatpush1.msra.mxu0 0.0
    %255 = vmatprep.subr.mxu0 0.0
    %256 = vmatpush1.msra.mxu0 0.0
    %257 = vmatprep.subr.mxu0 0.0
    %258 = vmatpush1.msra.mxu0 0.0
    %259 = vmatprep.subr.mxu0 0.0
    %260 = vmatpush1.msra.mxu0 0.0
    %261 = vmatprep.subr.mxu0 0.0
    %262 = vmatpush1.msra.mxu0 0.0
    %263 = vmatprep.subr.mxu0 0.0
    %264 = vmatpush1.msra.mxu0 0.0
    %265 = vmatprep.subr.mxu0 0.0
    %266 = vmatpush1.msra.mxu0 0.0
    %267 = vmatprep.subr.mxu0 0.0
    %268 = vmatpush1.msra.mxu0 0.0
    %269 = vmatprep.subr.mxu0 0.0
    %270 = vmatpush1.msra.mxu0 0.0
    %271 = vmatprep.subr.mxu0 0.0
    %272 = vmatpush1.msra.mxu0 0.0
    %273 = vmatprep.subr.mxu0 0.0
    %274 = vmatpush1.msra.mxu0 0.0
    %275 = vmatprep.subr.mxu0 0.0
    %276 = vmatpush1.msra.mxu0 0.0
    %277 = vmatprep.subr.mxu0 0.0
    %278 = vmatpush1.msra.mxu0 0.0
    %279 = vmatprep.subr.mxu0 0.0
    %280 = vmatpush1.msra.mxu0 0.0
    %281 = vmatprep.subr.mxu0 0.0
    %282 = vmatpush1.msra.mxu0 0.0
    %283 = vmatprep.subr.mxu0 0.0
    %284 = vmatpush1.msra.mxu0 0.0
    %285 = vmatprep.subr.mxu0 0.0
    %286 = vmatpush1.msra.mxu0 0.0
    %287 = vmatprep.subr.mxu0 0.0
    %288 = vmatpush1.msra.mxu0 0.0
    %289 = vmatprep.subr.mxu0 0.0
    %290 = vmatpush1.msra.mxu0 0.0
    %291 = vmatprep.subr.mxu0 0.0
    %292 = vmatpush1.msra.mxu0 0.0
    %293 = vmatprep.subr.mxu0 0.0
    %294 = vmatpush1.msra.mxu0 0.0
    %295 = vmatprep.subr.mxu0 0.0
    %296 = vmatpush1.msra.mxu0 0.0
    %297 = vmatprep.subr.mxu0 0.0
    %298 = vmatpush1.msra.mxu0 0.0
    %299 = vmatprep.subr.mxu0 0.0
    %300 = vmatpush1.msra.mxu0 0.0
    %301 = vmatprep.subr.mxu0 0.0
    %302 = vmatpush1.msra.mxu0 0.0
    %303 = vmatprep.subr.mxu0 0.0
    %304 = vmatpush1.msra.mxu0 0.0
    %305 = vmatprep.mubr.f32.mxu0 0.0
    %306 = vmatmul.mubr.f32.gmra.mrb[0].mxu0 %v239
    %v307 = vpop.f32.mrb[0].mxu0
    %v308 = vadd.f32 %v236, %v307
    %v309 = vpop.f32.mrb[0].mxu0
    %310 = vdwg.mxu0
    %v311 = vmul.f32 %v308, 0.5
    %v312 = vmul.f32 %v311, 1.442695
    %v313 = vpow.pop %v312
    %v314 = vld [vmem:[%s1] sm:$0xff]
    %316 = vrot.lane.b32.xlu0 %v313, 112
    %v317 = vpop.permute.xlu0 %316
    %v319 = vmul.f32 %v314, %v317
    %v320 = vadd.f32 %v308, %v319
    %v321 = vld [vmem:[%s8] sm:$0xff]
    %v322 = vld [vmem:[%s8 + $0x8] sm:$0xff]
    %v323 = vld [vmem:[%s9] sm:$0x1]
    %v325 = vlaneseq
    %v326 = vshrl.u32 %v325, 7
    %v327 = vsub.s32 0, %v326
    %v328 = vrot.slane %v323, %v327
    %vm330 = vcmask 130048
    %v332 = vsel %vm330, %v320, 0
    %334 = vmatprep.subr.mxu0 0.0
    %335 = vmatpush1.msra.mxu0 %v321
    %336 = vmatprep.subr.mxu0 0.0
    %337 = vmatpush1.msra.mxu0 %v322
    %338 = vmatprep.subr.mxu0 0.0
    %339 = vmatpush1.msra.mxu0 0.0
    %340 = vmatprep.subr.mxu0 0.0
    %341 = vmatpush1.msra.mxu0 0.0
    %342 = vmatprep.subr.mxu0 0.0
    %343 = vmatpush1.msra.mxu0 0.0
    %344 = vmatprep.subr.mxu0 0.0
    %345 = vmatpush1.msra.mxu0 0.0
    %346 = vmatprep.subr.mxu0 0.0
    %347 = vmatpush1.msra.mxu0 0.0
    %348 = vmatprep.subr.mxu0 0.0
    %349 = vmatpush1.msra.mxu0 0.0
    %350 = vmatprep.subr.mxu0 0.0
    %351 = vmatpush1.msra.mxu0 0.0
    %352 = vmatprep.subr.mxu0 0.0
    %353 = vmatpush1.msra.mxu0 0.0
    %354 = vmatprep.subr.mxu0 0.0
    %355 = vmatpush1.msra.mxu0 0.0
    %356 = vmatprep.subr.mxu0 0.0
    %357 = vmatpush1.msra.mxu0 0.0
    %358 = vmatprep.subr.mxu0 0.0
    %359 = vmatpush1.msra.mxu0 0.0
    %360 = vmatprep.subr.mxu0 0.0
    %361 = vmatpush1.msra.mxu0 0.0
    %362 = vmatprep.subr.mxu0 0.0
    %363 = vmatpush1.msra.mxu0 0.0
    %364 = vmatprep.subr.mxu0 0.0
    %365 = vmatpush1.msra.mxu0 0.0
    %366 = vmatprep.subr.mxu0 0.0
    %367 = vmatpush1.msra.mxu0 0.0
    %368 = vmatprep.subr.mxu0 0.0
    %369 = vmatpush1.msra.mxu0 0.0
    %370 = vmatprep.subr.mxu0 0.0
    %371 = vmatpush1.msra.mxu0 0.0
    %372 = vmatprep.subr.mxu0 0.0
    %373 = vmatpush1.msra.mxu0 0.0
    %374 = vmatprep.subr.mxu0 0.0
    %375 = vmatpush1.msra.mxu0 0.0
    %376 = vmatprep.subr.mxu0 0.0
    %377 = vmatpush1.msra.mxu0 0.0
    %378 = vmatprep.subr.mxu0 0.0
    %379 = vmatpush1.msra.mxu0 0.0
    %380 = vmatprep.subr.mxu0 0.0
    %381 = vmatpush1.msra.mxu0 0.0
    %382 = vmatprep.subr.mxu0 0.0
    %383 = vmatpush1.msra.mxu0 0.0
    %384 = vmatprep.subr.mxu0 0.0
    %385 = vmatpush1.msra.mxu0 0.0
    %386 = vmatprep.subr.mxu0 0.0
    %387 = vmatpush1.msra.mxu0 0.0
    %388 = vmatprep.subr.mxu0 0.0
    %389 = vmatpush1.msra.mxu0 0.0
    %390 = vmatprep.subr.mxu0 0.0
    %391 = vmatpush1.msra.mxu0 0.0
    %392 = vmatprep.subr.mxu0 0.0
    %393 = vmatpush1.msra.mxu0 0.0
    %394 = vmatprep.subr.mxu0 0.0
    %395 = vmatpush1.msra.mxu0 0.0
    %396 = vmatprep.subr.mxu0 0.0
    %397 = vmatpush1.msra.mxu0 0.0
    %398 = vmatprep.mubr.f32.mxu0 0.0
    %399 = vmatmul.mubr.f32.gmra.mrb[0].mxu0 %v332
    %v400 = vpop.f32.mrb[0].mxu0
    %v401 = vadd.f32 %v328, %v400
    %v402 = vpop.f32.mrb[0].mxu0
    %403 = vdwg.mxu0
    %v404 = vmax.f32 %v401, 0.0
    %v405 = vld [vmem:[%s10] sm:$0xff]
    %v406 = vld [vmem:[%s10 + $0x8] sm:$0xff]
    %v407 = vld [vmem:[%s10 + $0x10] sm:$0xff]
    %v408 = vld [vmem:[%s10 + $0x18] sm:$0xff]
    %v409 = vld [vmem:[%s11] sm:$0x1]
    %v411 = vlaneseq
    %v412 = vshrl.u32 %v411, 7
    %v413 = vsub.s32 0, %v412
    %v414 = vrot.slane %v409, %v413
    %v417 = vsel %vm152, %v404, 0
    %419 = vmatprep.subr.mxu0 0.0
    %420 = vmatpush1.msra.mxu0 %v405
    %421 = vmatprep.subr.mxu0 0.0
    %422 = vmatpush1.msra.mxu0 %v406
    %423 = vmatprep.subr.mxu0 0.0
    %424 = vmatpush1.msra.mxu0 %v407
    %425 = vmatprep.subr.mxu0 0.0
    %426 = vmatpush1.msra.mxu0 %v408
    %427 = vmatprep.subr.mxu0 0.0
    %428 = vmatpush1.msra.mxu0 0.0
    %429 = vmatprep.subr.mxu0 0.0
    %430 = vmatpush1.msra.mxu0 0.0
    %431 = vmatprep.subr.mxu0 0.0
    %432 = vmatpush1.msra.mxu0 0.0
    %433 = vmatprep.subr.mxu0 0.0
    %434 = vmatpush1.msra.mxu0 0.0
    %435 = vmatprep.subr.mxu0 0.0
    %436 = vmatpush1.msra.mxu0 0.0
    %437 = vmatprep.subr.mxu0 0.0
    %438 = vmatpush1.msra.mxu0 0.0
    %439 = vmatprep.subr.mxu0 0.0
    %440 = vmatpush1.msra.mxu0 0.0
    %441 = vmatprep.subr.mxu0 0.0
    %442 = vmatpush1.msra.mxu0 0.0
    %443 = vmatprep.subr.mxu0 0.0
    %444 = vmatpush1.msra.mxu0 0.0
    %445 = vmatprep.subr.mxu0 0.0
    %446 = vmatpush1.msra.mxu0 0.0
    %447 = vmatprep.subr.mxu0 0.0
    %448 = vmatpush1.msra.mxu0 0.0
    %449 = vmatprep.subr.mxu0 0.0
    %450 = vmatpush1.msra.mxu0 0.0
    %451 = vmatprep.subr.mxu0 0.0
    %452 = vmatpush1.msra.mxu0 0.0
    %453 = vmatprep.subr.mxu0 0.0
    %454 = vmatpush1.msra.mxu0 0.0
    %455 = vmatprep.subr.mxu0 0.0
    %456 = vmatpush1.msra.mxu0 0.0
    %457 = vmatprep.subr.mxu0 0.0
    %458 = vmatpush1.msra.mxu0 0.0
    %459 = vmatprep.subr.mxu0 0.0
    %460 = vmatpush1.msra.mxu0 0.0
    %461 = vmatprep.subr.mxu0 0.0
    %462 = vmatpush1.msra.mxu0 0.0
    %463 = vmatprep.subr.mxu0 0.0
    %464 = vmatpush1.msra.mxu0 0.0
    %465 = vmatprep.subr.mxu0 0.0
    %466 = vmatpush1.msra.mxu0 0.0
    %467 = vmatprep.subr.mxu0 0.0
    %468 = vmatpush1.msra.mxu0 0.0
    %469 = vmatprep.subr.mxu0 0.0
    %470 = vmatpush1.msra.mxu0 0.0
    %471 = vmatprep.subr.mxu0 0.0
    %472 = vmatpush1.msra.mxu0 0.0
    %473 = vmatprep.subr.mxu0 0.0
    %474 = vmatpush1.msra.mxu0 0.0
    %475 = vmatprep.subr.mxu0 0.0
    %476 = vmatpush1.msra.mxu0 0.0
    %477 = vmatprep.subr.mxu0 0.0
    %478 = vmatpush1.msra.mxu0 0.0
    %479 = vmatprep.subr.mxu0 0.0
    %480 = vmatpush1.msra.mxu0 0.0
    %481 = vmatprep.subr.mxu0 0.0
    %482 = vmatpush1.msra.mxu0 0.0
    %483 = vmatprep.mubr.f32.mxu0 0.0
    %484 = vmatmul.mubr.f32.gmra.mrb[0].mxu0 %v417
    %v485 = vpop.f32.mrb[0].mxu0
    %v486 = vadd.f32 %v414, %v485
    %v487 = vpop.f32.mrb[0].mxu0
    %488 = vdwg.mxu0
    %v489 = vmax.f32 %v486, 0.0
    %v490 = vld [vmem:[%s12] sm:$0xff]
    %v491 = vld [vmem:[%s12 + $0x8] sm:$0xff]
    %v492 = vld [vmem:[%s12 + $0x10] sm:$0xff]
    %v493 = vld [vmem:[%s12 + $0x18] sm:$0xff]
    %v494 = vld [vmem:[%s13] sm:$0x1]
    %v496 = vlaneseq
    %v497 = vshrl.u32 %v496, 7
    %v498 = vsub.s32 0, %v497
    %v499 = vrot.slane %v494, %v498
    %v502 = vsel %vm152, %v489, 0
    %504 = vmatprep.subr.mxu0 0.0
    %505 = vmatpush1.msra.mxu0 %v490
    %506 = vmatprep.subr.mxu0 0.0
    %507 = vmatpush1.msra.mxu0 %v491
    %508 = vmatprep.subr.mxu0 0.0
    %509 = vmatpush1.msra.mxu0 %v492
    %510 = vmatprep.subr.mxu0 0.0
    %511 = vmatpush1.msra.mxu0 %v493
    %512 = vmatprep.subr.mxu0 0.0
    %513 = vmatpush1.msra.mxu0 0.0
    %514 = vmatprep.subr.mxu0 0.0
    %515 = vmatpush1.msra.mxu0 0.0
    %516 = vmatprep.subr.mxu0 0.0
    %517 = vmatpush1.msra.mxu0 0.0
    %518 = vmatprep.subr.mxu0 0.0
    %519 = vmatpush1.msra.mxu0 0.0
    %520 = vmatprep.subr.mxu0 0.0
    %521 = vmatpush1.msra.mxu0 0.0
    %522 = vmatprep.subr.mxu0 0.0
    %523 = vmatpush1.msra.mxu0 0.0
    %524 = vmatprep.subr.mxu0 0.0
    %525 = vmatpush1.msra.mxu0 0.0
    %526 = vmatprep.subr.mxu0 0.0
    %527 = vmatpush1.msra.mxu0 0.0
    %528 = vmatprep.subr.mxu0 0.0
    %529 = vmatpush1.msra.mxu0 0.0
    %530 = vmatprep.subr.mxu0 0.0
    %531 = vmatpush1.msra.mxu0 0.0
    %532 = vmatprep.subr.mxu0 0.0
    %533 = vmatpush1.msra.mxu0 0.0
    %534 = vmatprep.subr.mxu0 0.0
    %535 = vmatpush1.msra.mxu0 0.0
    %536 = vmatprep.subr.mxu0 0.0
    %537 = vmatpush1.msra.mxu0 0.0
    %538 = vmatprep.subr.mxu0 0.0
    %539 = vmatpush1.msra.mxu0 0.0
    %540 = vmatprep.subr.mxu0 0.0
    %541 = vmatpush1.msra.mxu0 0.0
    %542 = vmatprep.subr.mxu0 0.0
    %543 = vmatpush1.msra.mxu0 0.0
    %544 = vmatprep.subr.mxu0 0.0
    %545 = vmatpush1.msra.mxu0 0.0
    %546 = vmatprep.subr.mxu0 0.0
    %547 = vmatpush1.msra.mxu0 0.0
    %548 = vmatprep.subr.mxu0 0.0
    %549 = vmatpush1.msra.mxu0 0.0
    %550 = vmatprep.subr.mxu0 0.0
    %551 = vmatpush1.msra.mxu0 0.0
    %552 = vmatprep.subr.mxu0 0.0
    %553 = vmatpush1.msra.mxu0 0.0
    %554 = vmatprep.subr.mxu0 0.0
    %555 = vmatpush1.msra.mxu0 0.0
    %556 = vmatprep.subr.mxu0 0.0
    %557 = vmatpush1.msra.mxu0 0.0
    %558 = vmatprep.subr.mxu0 0.0
    %559 = vmatpush1.msra.mxu0 0.0
    %560 = vmatprep.subr.mxu0 0.0
    %561 = vmatpush1.msra.mxu0 0.0
    %562 = vmatprep.subr.mxu0 0.0
    %563 = vmatpush1.msra.mxu0 0.0
    %564 = vmatprep.subr.mxu0 0.0
    %565 = vmatpush1.msra.mxu0 0.0
    %566 = vmatprep.subr.mxu0 0.0
    %567 = vmatpush1.msra.mxu0 0.0
    %568 = vmatprep.mubr.f32.mxu0 0.0
    %569 = vmatmul.mubr.f32.gmra.mrb[0].mxu0 %v502
    %v570 = vpop.f32.mrb[0].mxu0
    %v571 = vadd.f32 %v499, %v570
    %v572 = vpop.f32.mrb[0].mxu0
    %573 = vdwg.mxu0
    %v574 = vxor.u32 %v571, 2147483648
    %v575 = vmul.f32 %v574, 1.442695
    %v576 = vpow.pop %v575
    %v577 = vadd.f32 %v576, 1.0
    %v578 = vrcp.pop %v577
    %v579 = vmul.f32 1.0, %v578
    %580 = vst.msk [vmem:[#allocation2] sm:$0xff] %vm66, %v579
    %581 = vst.msk [vmem:[%s15] sm:$0xff] %vm152, %v308
    // Predicated region
    $region58: #{vae_forward.1} parent=1 // pred_check
      _
    $region59: #{vae_forward.1} parent=1 // pred_check_branch
      %583 = sbr.rel (0) target = $region61
    $region60: #{vae_forward.1} parent=1 // pred_region
      %s585 = ssub.s32 128, 128
      %586 = vsyncadd [#allocation3], %s585
      %s588 = sshll.u32 [#allocation2], 4
      %s589 = int_to_ptr.vmem [resolvable:$true] %s588
      %591 = dma.vmem_to_hbm [thread:$0]  %s589, 128, %s14, [#allocation3]
    $region61: #{vae_forward.1} parent=1 // pred_fallthru
      _
    // Predicated region
    $region62: #{vae_forward.1} parent=1 // pred_check
      _
    $region63: #{vae_forward.1} parent=1 // pred_check_branch
      %593 = sbr.rel (0) target = $region65
    $region64: #{vae_forward.1} parent=1 // pred_region
      _
    $region65: #{vae_forward.1} parent=1 // pred_fallthru
      _
    // Predicated region
    $region66: #{vae_forward.1} parent=1 // pred_check
      _
    $region67: #{vae_forward.1} parent=1 // pred_check_branch
      %595 = sbr.rel (0) target = $region69
    $region68: #{vae_forward.1} parent=1 // pred_region
      %596 = dma.done [#allocation3], 128
    $region69: #{vae_forward.1} parent=1 // pred_fallthru
      _
    // Predicated region
    $region70: #{vae_forward.1} parent=1 // pred_check
      _
    $region71: #{vae_forward.1} parent=1 // pred_check_branch
      %598 = sbr.rel (0) target = $region73
    $region72: #{vae_forward.1} parent=1 // pred_region
      _
    $region73: #{vae_forward.1} parent=1 // pred_fallthru
      _
    %599 = vsyncpa [#allocation3], 1

</llo_original>
